<compile_context>
chip_gen: v7x
topology: tpu7x:2x2x1
jax: 0.10.0
libtpu: 0.0.40
codegen_flags: <defaults>
</compile_context>

<pallas_src>
import jax
import jax.numpy as jnp
from jax.experimental import pallas as pl
from jax.experimental.pallas import tpu as pltpu


_DMA_SPLIT_THRESHOLD_BYTES = 8 << 20   # only split the copy for >= 8 MiB arrays
_MAX_DMA_CHUNKS = 4                    # 2-4 overlapped DMAs is plenty at roofline


def _chunk_rows(rows, nbytes):
    """Static split of the leading axis into 1..4 DMA chunk sizes."""
    if rows < 2 or nbytes < _DMA_SPLIT_THRESHOLD_BYTES:
        return (rows,)
    n = min(_MAX_DMA_CHUNKS, rows)
    base = rows // n
    sizes = [base] * n
    sizes[-1] += rows - base * n       # remainder goes to the last chunk
    return tuple(sizes)


def _make_dma_identity_kernel(chunk_sizes):
    """Kernel body: wt = t via direct HBM->HBM async copies (no VMEM staging)."""
    starts = []
    s = 0
    for sz in chunk_sizes:
        starts.append(s)
        s += sz

    def kernel(t_hbm, o_hbm, sems):
        copies = []
        # Start every DMA first, then wait — lets multiple chunks overlap.
        for c, (start, size) in enumerate(zip(starts, chunk_sizes)):
            cp = pltpu.make_async_copy(
                t_hbm.at[pl.ds(start, size)],
                o_hbm.at[pl.ds(start, size)],
                sems.at[c])
            cp.start()
            copies.append(cp)
        for cp in copies:
            cp.wait()

    return kernel


def get_weighted_topics(t, *, materialize_copy=False):
    """Pallas equivalent of GetWeightedTopics.forward (wt = t).

    Args:
        t: jnp array of shape [num_topics] or [batch, num_topics] (any shape
           and dtype is accepted — the op is an identity).
        materialize_copy: if False (default), return `t` unchanged — the
           optimal path for an identity op (zero HBM traffic, zero launch
           cost).  If True, produce a fresh HBM buffer with identical
           contents via an HBM->HBM DMA Pallas kernel running at the DMA
           roofline, with no VMEM pressure on any TPU generation.

    Returns:
        array with identical shape/dtype/values to `t`.
    """
    if not materialize_copy or t.ndim == 0 or t.size == 0:
        return t   # fast path: wt = t — skipping the kernel is strictly optimal

    nbytes = t.size * jnp.dtype(t.dtype).itemsize
    chunk_sizes = _chunk_rows(t.shape[0], nbytes)

    return pl.pallas_call(
        _make_dma_identity_kernel(chunk_sizes),
        out_shape=jax.ShapeDtypeStruct(t.shape, t.dtype),
        in_specs=[pl.BlockSpec(memory_space=pl.ANY)],    # raw HBM ref, no auto-DMA
        out_specs=pl.BlockSpec(memory_space=pl.ANY),     # raw HBM ref, no auto-DMA
        scratch_shapes=[pltpu.SemaphoreType.DMA((len(chunk_sizes),))],
        # Advisory: pure copy — zero FLOPs, read + write of every byte.
        cost_estimate=pl.CostEstimate(
            flops=0, transcendentals=0, bytes_accessed=2 * nbytes),
    )(t)


if __name__ == "__main__":
    key = jax.random.PRNGKey(0)
    num_topics = 128   # the module's only config knob; it has no parameters
    batch = 8

    # Batched topic vectors [batch, num_topics].
    t = jax.random.normal(key, (batch, num_topics), dtype=jnp.float32)

    # Fast path (default): wt = t, no kernel, zero HBM traffic.
    wt = get_weighted_topics(t)
    jax.block_until_ready(wt)
    assert wt.shape == t.shape and wt.dtype == t.dtype
    assert bool(jnp.array_equal(wt, t))

    # Materialized-copy path: single HBM->HBM DMA Pallas kernel.
    wt_copy = get_weighted_topics(t, materialize_copy=True)
    jax.block_until_ready(wt_copy)
    assert wt_copy.shape == t.shape and wt_copy.dtype == t.dtype
    assert bool(jnp.array_equal(wt_copy, t))

    # Single topic vector [num_topics] (docstring: "topic vector of dim=num_topics").
    t1 = jax.random.normal(jax.random.PRNGKey(1), (num_topics,), dtype=jnp.float32)
    wt1 = get_weighted_topics(t1, materialize_copy=True)
    jax.block_until_ready(wt1)
    assert wt1.shape == t1.shape and bool(jnp.array_equal(wt1, t1))

    # Ragged batch + non-128-multiple width + packed dtype: the HBM->HBM DMA
    # has no (8,128) BlockSpec constraint, so arbitrary shapes just work
    # (this was the VMEM-blowup / masked-store risk case in the tiled version).
    t2 = jax.random.normal(jax.random.PRNGKey(2), (5, 100),
                           dtype=jnp.float32).astype(jnp.bfloat16)
    wt2 = get_weighted_topics(t2, materialize_copy=True)
    jax.block_until_ready(wt2)
    assert wt2.shape == t2.shape and wt2.dtype == t2.dtype
    assert bool(jnp.array_equal(wt2, t2))

    # Under jit the fast path composes to a pure forward of `t` (no copy, no
    # kernel) — the optimal identity implementation.
    jit_fn = jax.jit(get_weighted_topics)
    wt3 = jit_fn(t)
    jax.block_until_ready(wt3)
    assert bool(jnp.array_equal(wt3, t))

    print("KERNEL_OK")
</pallas_src>

<mosaic_0001>
module attributes {stable_mosaic.version = 11 : i64} {
  func.func @kernel(%arg0: memref<8x128xf32, #tpu.memory_space<any>>, %arg1: memref<8x128xf32, #tpu.memory_space<any>>, %arg2: memref<1x!tpu.dma_semaphore, #tpu.memory_space<semaphore_mem>>) attributes {dimension_semantics = [], scalar_prefetch = 0 : i64, scratch_operands = 1 : i64, tpu.core_type = #tpu.core_type<tc>} {
    %c0_i32 = arith.constant 0 : i32
    %c0_i32_0 = arith.constant 0 : i32
    %c0_i32_1 = arith.constant 0 : i32
    %0 = tpu.memref_slice %arg0[%c0_i32_0, %c0_i32_1] : memref<8x128xf32, #tpu.memory_space<any>> -> memref<8x128xf32, #tpu.memory_space<any>>
    %c0_i32_2 = arith.constant 0 : i32
    %c0_i32_3 = arith.constant 0 : i32
    %1 = tpu.memref_slice %arg1[%c0_i32_2, %c0_i32_3] : memref<8x128xf32, #tpu.memory_space<any>> -> memref<8x128xf32, #tpu.memory_space<any>>
    %2 = tpu.memref_slice %arg2[%c0_i32] : memref<1x!tpu.dma_semaphore, #tpu.memory_space<semaphore_mem>> -> memref<1x!tpu.dma_semaphore, #tpu.memory_space<semaphore_mem>>
    %3 = tpu.memref_squeeze %2 : memref<1x!tpu.dma_semaphore, #tpu.memory_space<semaphore_mem>> -> memref<!tpu.dma_semaphore, #tpu.memory_space<semaphore_mem>>
    tpu.enqueue_dma source(%0 : memref<8x128xf32, #tpu.memory_space<any>>) target(%1 : memref<8x128xf32, #tpu.memory_space<any>>) target_semaphore(%3 : memref<!tpu.dma_semaphore, #tpu.memory_space<semaphore_mem>>)
    %c0_i32_4 = arith.constant 0 : i32
    %c0_i32_5 = arith.constant 0 : i32
    %c0_i32_6 = arith.constant 0 : i32
    %4 = tpu.memref_slice %arg0[%c0_i32_5, %c0_i32_6] : memref<8x128xf32, #tpu.memory_space<any>> -> memref<8x128xf32, #tpu.memory_space<any>>
    %c0_i32_7 = arith.constant 0 : i32
    %c0_i32_8 = arith.constant 0 : i32
    %5 = tpu.memref_slice %arg1[%c0_i32_7, %c0_i32_8] : memref<8x128xf32, #tpu.memory_space<any>> -> memref<8x128xf32, #tpu.memory_space<any>>
    %6 = tpu.memref_slice %arg2[%c0_i32_4] : memref<1x!tpu.dma_semaphore, #tpu.memory_space<semaphore_mem>> -> memref<1x!tpu.dma_semaphore, #tpu.memory_space<semaphore_mem>>
    %7 = tpu.memref_squeeze %6 : memref<1x!tpu.dma_semaphore, #tpu.memory_space<semaphore_mem>> -> memref<!tpu.dma_semaphore, #tpu.memory_space<semaphore_mem>>
    tpu.wait_dma2 semaphore(%7 : memref<!tpu.dma_semaphore, #tpu.memory_space<semaphore_mem>>) src(%4 : memref<8x128xf32, #tpu.memory_space<any>>) dst(%5 : memref<8x128xf32, #tpu.memory_space<any>>)
    return
  }
}

</mosaic_0001>

<llo_original>
// kernel: tpu_custom_call.1
$region0: #{tpu_custom_call.1}
  #allocation0 [shape = 'u32[]', space=smem, size = 0x4, offset = 0x4, fixed_abs, tag = 'smem constant byte address 0x4 - core index']
  #allocation1 [shape = 'u32[144,128]{1,0:T(1,128)}', space=vmem, size = 0x12000, scoped, tag = 'internal scratch']
  #allocation2 [shape = 's32[1]{0}', space=sflag, size = 0x4, scoped, tag = 'scratch operand']
  #allocation3 [shape = 's32[]', space=sflag, size = 0x4, offset = 0, fixed_abs, tag = 'sflag constant byte address 0x0 - dummy sync flag']
  #allocation4 [shape = 'u32[0]{0}', space=smem, size = 0, offset = 0, fixed_abs, tag = 'smem constant byte address 0x0 - null']
  %s0 = inlined_call_operand.hbm [shape: f32[8,128], index: 0, kind: input, shape index: {}]
  %s1 = inlined_call_operand.hbm [shape: f32[8,128], index: 1, kind: output, shape index: {}]
  %s2 = sld [smem:[#allocation0]]
  $region2: #{tpu_custom_call.1} parent=0
    _
  %s4 = ssub.s32 1, %s2
  %s5 = scalar_select 0, %s4, %s2
  %s7 = sshll.u32 1, 14
  %s8 = sxor.u32 4294967295, %s7
  %s11 = sshll.u32 3, 24
  %s12 = sxor.u32 4294967295, %s11
  %s13 = sand.u32 0, %s12
  %s15 = sor.u32 %s13, 0
  %18 = dma.general %s0, 128, %s1, [#allocation2], [#allocation3], [#allocation4], %s15, 0
  %s19 = smul.u32 8, 1
  %s20 = sshll.u32 %s19, 4
  %21 = dma.done [#allocation2], %s20
  %22 = vsyncmov [#allocation2]
  %s23 = vpop.sfrf %22
  %p24 = scmp.eq.s32.totalorder %s23, 0
  %p25 = pneg %p24
  %27 = shalt.err (%p25)

</llo_original>
